<compile_context>
chip_gen: v7x
topology: tpu7x:2x2x1
jax: 0.10.0
libtpu: 0.0.40
codegen_flags: <defaults>
</compile_context>

<pallas_src>
import functools
import math

import jax
import jax.numpy as jnp
from jax.experimental import pallas as pl
from jax.experimental.pallas import tpu as pltpu


def _unpool_kernel(lat_ref, u_ref, out_ref, *, c_u_flat: int):
    """One grid step = g latent rows (= g*knodes nodes).

    lat_ref : (g, 1, C_out)       latent rows (M already folded into channels)
    u_ref   : (g, K, C_u)         skip features for these nodes
    out_ref : (g, K, C_out)
    """
    lat = lat_ref[...]                              # (g, 1, C_out)
    u = u_ref[...]                                  # (g, K, C_u)
    g, k, _ = u.shape
    c_out = lat.shape[-1]

    # repeat_interleave(latent, knodes, dim=0) == sublane broadcast over K.
    lat_rep = jnp.broadcast_to(lat, (g, k, c_out))

    if c_u_flat == c_out:
        out = u + lat_rep
    else:
        # channels only present in the latent: pure broadcast, no add-with-zeros
        out = jnp.concatenate(
            [u + lat_rep[..., :c_u_flat], lat_rep[..., c_u_flat:]], axis=-1)
    out_ref[...] = out.astype(out_ref.dtype)


def _pick_latent_rows_per_block(b_lat: int, knodes: int, c_u_flat: int,
                                c_out_flat: int, target_nodes: int = 1024,
                                vmem_budget_bytes: int = 12 * 1024 * 1024) -> int:
    """Largest divisor g of b_lat with g*knodes <= target_nodes and the
    (double-buffered, padded) tiles within a conservative VMEM budget."""
    k_pad = max(8, -(-knodes // 8) * 8)
    cu_pad = -(-c_u_flat // 128) * 128
    co_pad = -(-c_out_flat // 128) * 128
    bytes_per_row = 2 * 4 * (k_pad * (cu_pad + co_pad) + 8 * co_pad)
    best = 1
    for g in range(1, b_lat + 1):
        if b_lat % g:
            continue
        if g * knodes <= target_nodes and g * bytes_per_row <= vmem_budget_bytes:
            best = g
    return best


def latent_unpool_degree(latent, u_feat, knodes: int, target_nodes: int = 1024):
    """latent: (B_lat, C_lat); u_feat: (B_lat*knodes, C_u, *M) -> (N, C_lat, *M)."""
    b_lat, c_lat = latent.shape
    n = u_feat.shape[0]
    c_u = u_feat.shape[1]
    trailing = u_feat.shape[2:]
    m = int(math.prod(trailing)) if trailing else 1

    assert n == b_lat * knodes, "u_features rows must equal B_latent * knodes"
    assert c_lat >= c_u, "latent channels must cover skip channels"

    c_u_flat = c_u * m
    c_out_flat = c_lat * m

    # Lane-dense layout: fold M into channels; nodes as (B_lat, knodes, C*M).
    u3 = u_feat.reshape(b_lat, knodes, c_u_flat)
    # Broadcast latent over M once wrapper-side (tiny array), add a unit node axis.
    lat3 = jnp.broadcast_to(
        latent[:, :, None], (b_lat, c_lat, m)).reshape(b_lat, 1, c_out_flat)

    out_dtype = jnp.result_type(latent.dtype, u_feat.dtype)
    g = _pick_latent_rows_per_block(b_lat, knodes, c_u_flat, c_out_flat,
                                    target_nodes)
    grid = (b_lat // g,)

    kernel = functools.partial(_unpool_kernel, c_u_flat=c_u_flat)
    out3 = pl.pallas_call(
        kernel,
        out_shape=jax.ShapeDtypeStruct((b_lat, knodes, c_out_flat), out_dtype),
        grid_spec=pltpu.PrefetchScalarGridSpec(
            num_scalar_prefetch=0,
            grid=grid,
            in_specs=[
                # g latent rows per node block, pipelined with the grid
                pl.BlockSpec((g, 1, c_out_flat), lambda i: (i, 0, 0)),
                # g*knodes nodes worth of skip features per grid step
                pl.BlockSpec((g, knodes, c_u_flat), lambda i: (i, 0, 0)),
            ],
            out_specs=pl.BlockSpec((g, knodes, c_out_flat), lambda i: (i, 0, 0)),
        ),
        compiler_params=pltpu.CompilerParams(
            dimension_semantics=("parallel",),   # node blocks are independent
            vmem_limit_bytes=32 * 1024 * 1024,   # safe on v5e/v6e/v7x
        ),
    )(lat3, u3)

    return out3.reshape((n, c_lat) + trailing)


class LatentUnpool:
    """JAX/Pallas equivalent of Latent_Unpool (fibers given as {degree: channels})."""

    def __init__(self, fiber_in: dict, fiber_add: dict, knodes: int,
                 target_block_nodes: int = 1024):
        degrees = set(fiber_in) | set(fiber_add)
        # Fiber.combine_max: union of degrees, max channels per degree
        self.fiber_out = {d: max(fiber_in.get(d, 0), fiber_add.get(d, 0))
                          for d in degrees}
        self.node_repeat = knodes
        self.target_block_nodes = target_block_nodes

    def __call__(self, features: dict, u_features: dict) -> dict:
        out_feats = {}
        for cd in sorted(self.fiber_out, key=int):
            if cd in features:
                out_feats[cd] = latent_unpool_degree(
                    features[cd], u_features[cd], self.node_repeat,
                    self.target_block_nodes)
            else:
                # degree only in the U-net skip path: pass through unchanged
                out_feats[cd] = u_features[cd]
        return out_feats


def _reference_degree(lat, u, knodes):
    c_lat, c_u = lat.shape[1], u.shape[1]
    lat_rep = jnp.repeat(lat, knodes, axis=0)[..., None]
    zeros = jnp.zeros((u.shape[0], c_lat - c_u) + u.shape[2:], u.dtype)
    return lat_rep + jnp.concatenate([u, zeros], axis=1)


def _check(mod, features, u_features):
    out = jax.block_until_ready(mod(features, u_features))
    ok = True
    for cd, val in out.items():
        if cd in features:
            ref = _reference_degree(features[cd], u_features[cd], mod.node_repeat)
        else:
            ref = u_features[cd]
        ok &= (val.shape == ref.shape)
        ok &= bool(jnp.allclose(val, ref, atol=1e-6, rtol=1e-6))
    return ok


if __name__ == "__main__":
    # --- test 1: tiny config (single block, full-array tiles) ---
    key = jax.random.PRNGKey(0)
    knodes = 4
    b_lat = 2
    n = b_lat * knodes

    fiber_in = {"0": 32, "1": 16}
    fiber_add = {"0": 16, "1": 16, "2": 8}

    k0, k1, k2, k3, k4 = jax.random.split(key, 5)
    features = {
        "0": jax.random.normal(k0, (b_lat, 32), jnp.float32),
        "1": jax.random.normal(k1, (b_lat, 16), jnp.float32),
    }
    u_features = {
        "0": jax.random.normal(k2, (n, 16, 1), jnp.float32),
        "1": jax.random.normal(k3, (n, 16, 3), jnp.float32),
        "2": jax.random.normal(k4, (n, 8, 5), jnp.float32),
    }
    mod = LatentUnpool(fiber_in, fiber_add, knodes)
    ok = _check(mod, features, u_features)

    # --- test 2: more nodes, forces a multi-block grid (grid=(2,)) ---
    knodes2, b_lat2 = 8, 16
    n2 = b_lat2 * knodes2
    k5, k6, k7, k8 = jax.random.split(jax.random.PRNGKey(1), 4)
    features2 = {
        "0": jax.random.normal(k5, (b_lat2, 32), jnp.float32),
        "1": jax.random.normal(k6, (b_lat2, 16), jnp.float32),
    }
    u_features2 = {
        "0": jax.random.normal(k7, (n2, 16, 1), jnp.float32),
        "1": jax.random.normal(k8, (n2, 16, 3), jnp.float32),
    }
    mod2 = LatentUnpool({"0": 32, "1": 16}, {"0": 16, "1": 16}, knodes2,
                        target_block_nodes=64)
    ok &= _check(mod2, features2, u_features2)

    assert ok, "Pallas output does not match reference"
    print("KERNEL_OK")
</pallas_src>

<mosaic_0001>
module attributes {stable_mosaic.version = 11 : i64} {
  func.func @_unpool_kernel(%arg0: i32, %arg1: memref<2x1x32xf32, #tpu.memory_space<vmem>>, %arg2: memref<2x4x16xf32, #tpu.memory_space<vmem>>, %arg3: memref<2x4x32xf32, #tpu.memory_space<vmem>>) attributes {dimension_semantics = [#tpu.dimension_semantics<parallel>], iteration_bounds = array<i64: 1>, scalar_prefetch = 0 : i64, scratch_operands = 0 : i64, tpu.core_type = #tpu.core_type<tc>, window_params = [{transform_indices = @transform_0, window_bounds = array<i64: 2, 1, 32>}, {transform_indices = @transform_1, window_bounds = array<i64: 2, 4, 16>}, {transform_indices = @transform_2, window_bounds = array<i64: 2, 4, 32>}]} {
    %c0 = arith.constant 0 : index
    %c0_0 = arith.constant 0 : index
    %c0_1 = arith.constant 0 : index
    %0 = vector.load %arg1[%c0, %c0_0, %c0_1] : memref<2x1x32xf32, #tpu.memory_space<vmem>>, vector<2x1x32xf32>
    %c0_2 = arith.constant 0 : index
    %c0_3 = arith.constant 0 : index
    %c0_4 = arith.constant 0 : index
    %1 = vector.load %arg2[%c0_2, %c0_3, %c0_4] : memref<2x4x16xf32, #tpu.memory_space<vmem>>, vector<2x4x16xf32>
    %2 = vector.shape_cast %0 : vector<2x1x32xf32> to vector<2x1x32xf32>
    %3 = vector.broadcast %2 : vector<2x1x32xf32> to vector<2x4x32xf32>
    %4 = vector.extract_strided_slice %3 {offsets = [0, 0, 0], sizes = [2, 4, 16], strides = [1, 1, 1]} : vector<2x4x32xf32> to vector<2x4x16xf32>
    %5 = arith.addf %1, %4 : vector<2x4x16xf32>
    %6 = vector.extract_strided_slice %3 {offsets = [0, 0, 16], sizes = [2, 4, 16], strides = [1, 1, 1]} : vector<2x4x32xf32> to vector<2x4x16xf32>
    %7 = tpu.concatenate %5, %6 in 2 : vector<2x4x16xf32>, vector<2x4x16xf32> -> vector<2x4x32xf32>
    %c0_5 = arith.constant 0 : index
    %c0_6 = arith.constant 0 : index
    %c0_7 = arith.constant 0 : index
    %8 = vector.load %arg3[%c0_5, %c0_6, %c0_7] : memref<2x4x32xf32, #tpu.memory_space<vmem>>, vector<2x4x32xf32>
    tpu.vector_store %arg3[%c0_5, %c0_6, %c0_7], %7 {strides = array<i32>} : memref<2x4x32xf32, #tpu.memory_space<vmem>>, vector<2x4x32xf32>,
    return
  }
  func.func @transform_0(%arg0: i32) -> (i32, i32, i32) {
    %c0_i32 = arith.constant 0 : i32
    %c0_i32_0 = arith.constant 0 : i32
    %c0_i32_1 = arith.constant 0 : i32
    return %arg0, %c0_i32, %c0_i32_0 : i32, i32, i32
  }
  func.func @transform_1(%arg0: i32) -> (i32, i32, i32) {
    %c0_i32 = arith.constant 0 : i32
    %c0_i32_0 = arith.constant 0 : i32
    %c0_i32_1 = arith.constant 0 : i32
    return %arg0, %c0_i32, %c0_i32_0 : i32, i32, i32
  }
  func.func @transform_2(%arg0: i32) -> (i32, i32, i32) {
    %c0_i32 = arith.constant 0 : i32
    %c0_i32_0 = arith.constant 0 : i32
    %c0_i32_1 = arith.constant 0 : i32
    return %arg0, %c0_i32, %c0_i32_0 : i32, i32, i32
  }
}

</mosaic_0001>

<llo_original>
// kernel: tpu_custom_call.1
$region0: #{tpu_custom_call.1}
  #allocation0 [shape = 'u32[]', space=smem, size = 0x4, offset = 0x4, fixed_abs, tag = 'smem constant byte address 0x4 - core index']
  #allocation1 [shape = 'u32[144,128]{1,0:T(1,128)}', space=vmem, size = 0x12000, scoped, tag = 'internal scratch']
  %s0 = inlined_call_operand.hbm [shape: f32[2,1,32], index: 0, kind: input, shape index: {}]
  %s1 = inlined_call_operand.hbm [shape: f32[2,4,16], index: 1, kind: input, shape index: {}]
  %s2 = inlined_call_operand.hbm [shape: f32[2,4,32], index: 2, kind: output, shape index: {}]
  %s3 = sld [smem:[#allocation0]]
  $region26: #{tpu_custom_call.1} parent=0
    _
  %s5 = ssub.s32 1, %s3
  %s6 = scalar_select 0, %s5, %s3
  $region1: #{tpu_custom_call.1} parent=0
    #allocation2 [shape = 'u8[1024]{0}', space=vmem, size = 0x400, scoped, tag = 'input window, operand 0, single buffered']
    #allocation3 [shape = 's32[1]{0}', space=sflag, size = 0x4, scoped, tag = 'scoped memory for tpu_custom_call.1']
    #allocation4 [shape = 's32[1]{0}', space=sflag, size = 0x4, scoped, tag = 'scoped memory for tpu_custom_call.1']
    #allocation5 [shape = 'u8[4096]{0}', space=vmem, size = 0x1000, scoped, tag = 'input window, operand 1, single buffered']
    #allocation6 [shape = 's32[1]{0}', space=sflag, size = 0x4, scoped, tag = 'scoped memory for tpu_custom_call.1']
    #allocation7 [shape = 'u8[4096]{0}', space=vmem, size = 0x1000, scoped, tag = 'output window, operand 0, single buffered']
    %7 = vsyncpa [#allocation3], 0
    %8 = vsyncpa [#allocation6], 0
    %9 = vsyncpa [#allocation4], 0
    // Predicated region
    $region2: #{tpu_custom_call.1} parent=1 // pred_check
      _
    $region3: #{tpu_custom_call.1} parent=1 // pred_check_branch
      %11 = sbr.rel (0) target = $region5
    $region4: #{tpu_custom_call.1} parent=1 // pred_region
      %s13 = ssub.s32 32, 32
      %14 = vsyncadd [#allocation3], %s13
      %s15 = sshll.u32 [#allocation2], 4
      %s16 = int_to_ptr.vmem [resolvable:$true] %s15
      %21 = dma.hbm_to_vmem [thread:$0]  %s0, 32, %s16, [#allocation3], 16, 16, 1
    $region5: #{tpu_custom_call.1} parent=1 // pred_fallthru
      _
    // Predicated region
    $region6: #{tpu_custom_call.1} parent=1 // pred_check
      _
    $region7: #{tpu_custom_call.1} parent=1 // pred_check_branch
      %23 = sbr.rel (0) target = $region9
    $region8: #{tpu_custom_call.1} parent=1 // pred_region
      %s25 = ssub.s32 128, 128
      %26 = vsyncadd [#allocation6], %s25
      %s27 = sshll.u32 [#allocation5], 4
      %s28 = int_to_ptr.vmem [resolvable:$true] %s27
      %33 = dma.hbm_to_vmem [thread:$0]  %s1, 128, %s28, [#allocation6], 64, 64, 4
    $region9: #{tpu_custom_call.1} parent=1 // pred_fallthru
      _
    // Predicated region
    $region10: #{tpu_custom_call.1} parent=1 // pred_check
      _
    $region11: #{tpu_custom_call.1} parent=1 // pred_check_branch
      %35 = sbr.rel (0) target = $region13
    $region12: #{tpu_custom_call.1} parent=1 // pred_region
      %36 = dma.done [#allocation3], 32
    $region13: #{tpu_custom_call.1} parent=1 // pred_fallthru
      _
    // Predicated region
    $region14: #{tpu_custom_call.1} parent=1 // pred_check
      _
    $region15: #{tpu_custom_call.1} parent=1 // pred_check_branch
      %38 = sbr.rel (0) target = $region17
    $region16: #{tpu_custom_call.1} parent=1 // pred_region
      %39 = dma.done [#allocation6], 128
    $region17: #{tpu_custom_call.1} parent=1 // pred_fallthru
      _
    %v40 = vld [vmem:[#allocation2] sm:$0x1]
    %v41 = vld [vmem:[#allocation2 + $0x1] sm:$0x1]
    %v42 = vld [vmem:[#allocation5] sm:$0xf]
    %v43 = vld [vmem:[#allocation5 + $0x4] sm:$0xf]
    %v46 = vlaneseq
    %v47 = vshrl.u32 %v46, 7
    %v48 = vsub.s32 0, %v47
    %v49 = vrot.slane %v40, %v48
    %v50 = vlaneseq
    %v51 = vshrl.u32 %v50, 7
    %v52 = vsub.s32 0, %v51
    %v53 = vrot.slane %v41, %v52
    %v56 = vadd.f32 %v42, %v49
    %v57 = vadd.f32 %v43, %v53
    %vm58 = vcmask 130048
    %v59 = vsel %vm58, %v56, %v49
    %v60 = vsel %vm58, %v57, %v53
    %vm61 = vcmask 257024
    %62 = vst.msk [vmem:[#allocation7] sm:$0xf] %vm61, %v59
    %63 = vst.msk [vmem:[#allocation7 + $0x4] sm:$0xf] %vm61, %v60
    // Predicated region
    $region18: #{tpu_custom_call.1} parent=1 // pred_check
      _
    $region19: #{tpu_custom_call.1} parent=1 // pred_check_branch
      %65 = sbr.rel (0) target = $region21
    $region20: #{tpu_custom_call.1} parent=1 // pred_region
      %s67 = ssub.s32 128, 128
      %68 = vsyncadd [#allocation4], %s67
      %s69 = sshll.u32 [#allocation7], 4
      %s70 = int_to_ptr.vmem [resolvable:$true] %s69
      %75 = dma.vmem_to_hbm [thread:$0]  %s70, 128, %s2, [#allocation4], 64, 64, 4
    $region21: #{tpu_custom_call.1} parent=1 // pred_fallthru
      _
    // Predicated region
    $region22: #{tpu_custom_call.1} parent=1 // pred_check
      _
    $region23: #{tpu_custom_call.1} parent=1 // pred_check_branch
      %77 = sbr.rel (0) target = $region25
    $region24: #{tpu_custom_call.1} parent=1 // pred_region
      %78 = dma.done [#allocation4], 128
    $region25: #{tpu_custom_call.1} parent=1 // pred_fallthru
      _
    %79 = vsyncpa [#allocation3], 1
    %80 = vsyncpa [#allocation6], 1
    %81 = vsyncpa [#allocation4], 1

</llo_original>
